<compile_context>
chip_gen: v5e
topology: v5e:2x2
jax: 0.10.0
libtpu: 0.0.40
codegen_flags: <defaults>
</compile_context>

<pallas_src>
import jax
import jax.numpy as jnp
from jax.experimental import pallas as pl
from jax.experimental.pallas import tpu as pltpu


# ---------------------------------------------------------------------------
# Kernels (channels on sublanes, length on lanes)
# ---------------------------------------------------------------------------
def _resnet_block_kernel_shortcut(
    x_ref, c_ref,
    bn0_s_ref, bn0_b_ref,
    w0_ref, b0_ref,
    wcat_ref, bout_ref,
    o_ref,
):
    # x: (in_dim, tL), c: (c_dim, tL)
    x = x_ref[...].astype(jnp.float32)
    c = c_ref[...].astype(jnp.float32)

    # h0 = relu(bn_0(x))            (bn_0 folded to per-channel affine, f32 VPU)
    h0 = jnp.maximum(x * bn0_s_ref[...] + bn0_b_ref[...], 0.0)
    # h1 = relu(bn_1(fc_0(h0)))     (bn_1 folded into W0'/b0'; bf16 MXU, f32 acc)
    h1 = jnp.maximum(
        jnp.dot(w0_ref[...], h0.astype(jnp.bfloat16),
                preferred_element_type=jnp.float32)
        + b0_ref[...], 0.0)
    # out = [W1|Wc|Ws] @ [h1; c; x] + (b1 + bc)   -- single MXU pass
    hcat = jnp.concatenate([h1, c, x], axis=0).astype(jnp.bfloat16)
    acc = jnp.dot(wcat_ref[...], hcat, preferred_element_type=jnp.float32)
    o_ref[...] = (acc + bout_ref[...]).astype(o_ref.dtype)


def _resnet_block_kernel_identity(
    x_ref, c_ref,
    bn0_s_ref, bn0_b_ref,
    w0_ref, b0_ref,
    wcat_ref, bout_ref,
    o_ref,
):
    x = x_ref[...].astype(jnp.float32)
    c = c_ref[...].astype(jnp.float32)

    h0 = jnp.maximum(x * bn0_s_ref[...] + bn0_b_ref[...], 0.0)
    h1 = jnp.maximum(
        jnp.dot(w0_ref[...], h0.astype(jnp.bfloat16),
                preferred_element_type=jnp.float32)
        + b0_ref[...], 0.0)
    # out = [W1|Wc] @ [h1; c] + x + (b1 + bc)   (identity shortcut = VPU add)
    hcat = jnp.concatenate([h1, c], axis=0).astype(jnp.bfloat16)
    acc = jnp.dot(wcat_ref[...], hcat, preferred_element_type=jnp.float32)
    o_ref[...] = (acc + x + bout_ref[...]).astype(o_ref.dtype)


# ---------------------------------------------------------------------------
# Tile selection
# ---------------------------------------------------------------------------
def _pick_lane_tile(L, B, tl):
    # Requested tile rounded down to a 128 multiple; cap at 8192 so the
    # double-buffered x/c/out tiles + f32 temporaries stay well inside v5e's
    # 16 MiB default scoped VMEM (and v7x's 32 MiB) without raising limits.
    t = max(128, (min(tl, 8192) // 128) * 128)
    # Never larger than L rounded up to 128 (edge block is masked anyway).
    t = min(t, 128 * pl.cdiv(L, 128))
    # Both grid axes are "parallel"; on 2-TC chips (v7x) keep >= 2 grid steps
    # when B == 1 so the second core is not idle.
    if B == 1 and pl.cdiv(L, t) < 2 and L > 128:
        t = max(128, 128 * pl.cdiv(pl.cdiv(L, 2), 128))
    return t


# ---------------------------------------------------------------------------
# Wrapper
# ---------------------------------------------------------------------------
def resnet_block_conv1d(x, c, params, *, tl=4096):
    """x: (B, in_dim, L), c: (B, c_dim, L) -> (B, out_dim, L)   [NCL kept]."""
    B, in_dim, L = x.shape
    _, c_dim, _ = c.shape
    hidden_dim = params["w0f"].shape[0]
    out_dim = params["wcat"].shape[0]
    has_shortcut = params["has_shortcut"]

    tile_l = _pick_lane_tile(L, B, tl)
    grid = (B, pl.cdiv(L, tile_l))          # no padding: edge block is masked

    def act_spec(ch):
        # batch dim squeezed; kernel sees (ch, tile_l)
        return pl.BlockSpec((None, ch, tile_l), lambda b, l: (b, 0, l))

    def par_spec(shape):
        return pl.BlockSpec(shape, lambda b, l: (0, 0))

    in_specs = [
        act_spec(in_dim),                          # x
        act_spec(c_dim),                           # c
        par_spec((in_dim, 1)),                     # bn0 scale
        par_spec((in_dim, 1)),                     # bn0 bias
        par_spec((hidden_dim, in_dim)),            # W0'  (bn_1 folded, bf16)
        par_spec((hidden_dim, 1)),                 # b0'
        par_spec(params["wcat"].shape),            # [W1|Wc(|Ws)] stacked, bf16
        par_spec((out_dim, 1)),                    # b1 + bc
    ]
    kernel = (_resnet_block_kernel_shortcut if has_shortcut
              else _resnet_block_kernel_identity)

    out = pl.pallas_call(
        kernel,
        grid=grid,
        in_specs=in_specs,
        out_specs=pl.BlockSpec((None, out_dim, tile_l), lambda b, l: (b, 0, l)),
        out_shape=jax.ShapeDtypeStruct((B, out_dim, L), x.dtype),
        compiler_params=pltpu.CompilerParams(
            dimension_semantics=("parallel", "parallel")),
    )(
        x, c,
        params["bn0_scale"], params["bn0_bias"],
        params["w0f"], params["b0f"],
        params["wcat"], params["b_out"],
    )
    return out


# ---------------------------------------------------------------------------
# Parameter handling
# ---------------------------------------------------------------------------
def fold_params(mp, eps=1e-5):
    """Fold eval-mode BN + biases and prestack output weights (bf16 MXU path).

    Module-style params (PyTorch shapes):
      gamma0/beta0/mean0/var0: (in_dim,)     bn_0
      gamma1/beta1/mean1/var1: (hidden_dim,) bn_1
      w0: (hidden, in)   b0: (hidden,)       fc_0  (Conv1d k=1 weight squeezed)
      w1: (out, hidden)  b1: (out,)          fc_1
      wc: (out, c_dim)   bc: (out,)          fc_c
      ws: (out, in) or None                  shortcut (bias-free)
    """
    s0 = mp["gamma0"] / jnp.sqrt(mp["var0"] + eps)
    t0 = mp["beta0"] - mp["mean0"] * s0
    s1 = mp["gamma1"] / jnp.sqrt(mp["var1"] + eps)
    t1 = mp["beta1"] - mp["mean1"] * s1

    has_shortcut = mp.get("ws") is not None
    w_parts = [mp["w1"], mp["wc"]]           # contraction order: [h1; c; (x)]
    if has_shortcut:
        w_parts.append(mp["ws"])
    wcat = jnp.concatenate(w_parts, axis=1)

    return dict(
        bn0_scale=s0[:, None].astype(jnp.float32),
        bn0_bias=t0[:, None].astype(jnp.float32),
        w0f=(mp["w0"] * s1[:, None]).astype(jnp.bfloat16),   # bn_1 scale folded
        b0f=((mp["b0"] * s1 + t1)[:, None]).astype(jnp.float32),
        wcat=wcat.astype(jnp.bfloat16),
        b_out=((mp["b1"] + mp["bc"])[:, None]).astype(jnp.float32),
        has_shortcut=has_shortcut,
    )


def make_module_params(key, c_dim, in_dim, hidden_dim, out_dim, dtype=jnp.float32):
    ks = jax.random.split(key, 15)

    def bn(k0, k1, k2, k3, dim):
        return (jax.random.normal(k0, (dim,), dtype) * 0.1 + 1.0,
                jax.random.normal(k1, (dim,), dtype) * 0.1,
                jax.random.normal(k2, (dim,), dtype) * 0.1,
                jax.random.uniform(k3, (dim,), dtype, 0.5, 1.5))

    g0, b0_, m0, v0 = bn(ks[0], ks[1], ks[2], ks[3], in_dim)
    g1, b1_, m1, v1 = bn(ks[4], ks[5], ks[6], ks[7], hidden_dim)
    return dict(
        gamma0=g0, beta0=b0_, mean0=m0, var0=v0,
        gamma1=g1, beta1=b1_, mean1=m1, var1=v1,
        w0=jax.random.normal(ks[8], (hidden_dim, in_dim), dtype) * 0.05,
        b0=jax.random.normal(ks[9], (hidden_dim,), dtype) * 0.05,
        w1=jax.random.normal(ks[10], (out_dim, hidden_dim), dtype) * 0.05,
        b1=jax.random.normal(ks[11], (out_dim,), dtype) * 0.05,
        wc=jax.random.normal(ks[12], (out_dim, c_dim), dtype) * 0.05,
        bc=jax.random.normal(ks[13], (out_dim,), dtype) * 0.05,
        ws=(None if in_dim == out_dim
            else jax.random.normal(ks[14], (out_dim, in_dim), dtype) * 0.05),
    )


def reference_forward(x, c, mp, eps=1e-5):
    """Pure-JAX reference mirroring the PyTorch module (eval-mode BN, NCL)."""
    def bn(v, gamma, beta, mean, var):
        s = gamma / jnp.sqrt(var + eps)
        return v * s[None, :, None] + (beta - mean * s)[None, :, None]

    def conv1x1(v, w, b=None):
        out = jnp.einsum('oc,bcl->bol', w, v)
        return out if b is None else out + b[None, :, None]

    h0 = jax.nn.relu(bn(x, mp["gamma0"], mp["beta0"], mp["mean0"], mp["var0"]))
    net = conv1x1(h0, mp["w0"], mp["b0"])
    h1 = jax.nn.relu(bn(net, mp["gamma1"], mp["beta1"], mp["mean1"], mp["var1"]))
    dx = conv1x1(h1, mp["w1"], mp["b1"])
    xs = x if mp.get("ws") is None else conv1x1(x, mp["ws"])
    return xs + dx + conv1x1(c, mp["wc"], mp["bc"])


# ---------------------------------------------------------------------------
if __name__ == "__main__":
    configs = [
        # (B, L,    c_dim, in_dim, hidden_dim, out_dim, tl)
        (2, 600,  8, 16, 32, 24, 4096),   # conv shortcut, ragged L -> masked edge block
        (2, 384,  8, 16, 16, 16, 4096),   # identity shortcut, tile clamped to L
        (2, 1200, 8, 16, 32, 24, 512),    # multi-step grid over L + partial last tile
    ]
    for i, (B, L, c_dim, in_dim, hidden_dim, out_dim, tl) in enumerate(configs):
        key = jax.random.fold_in(jax.random.PRNGKey(0), i)
        kx, kc, kp = jax.random.split(key, 3)
        x = jax.random.normal(kx, (B, in_dim, L), jnp.float32)   # PyTorch NCL input
        c = jax.random.normal(kc, (B, c_dim, L), jnp.float32)
        mp = make_module_params(kp, c_dim, in_dim, hidden_dim, out_dim)
        kparams = fold_params(mp)

        out = jax.block_until_ready(resnet_block_conv1d(x, c, kparams, tl=tl))
        ref = reference_forward(x, c, mp)

        assert out.shape == (B, out_dim, L)
        assert bool(jnp.all(jnp.isfinite(out))), f"non-finite output (config {i})"
        # bf16 MXU path -> relaxed tolerance vs the f32 reference.
        assert jnp.allclose(out, ref, atol=2e-2, rtol=2e-2), f"mismatch (config {i})"

    print("KERNEL_OK")
</pallas_src>

<mosaic_0001>
module attributes {stable_mosaic.version = 11 : i64} {
  func.func @_resnet_block_kernel_shortcut(%arg0: i32, %arg1: i32, %arg2: memref<1x16x640xf32, #tpu.memory_space<vmem>>, %arg3: memref<1x8x640xf32, #tpu.memory_space<vmem>>, %arg4: memref<16x1xf32, #tpu.memory_space<vmem>>, %arg5: memref<16x1xf32, #tpu.memory_space<vmem>>, %arg6: memref<32x16xbf16, #tpu.memory_space<vmem>>, %arg7: memref<32x1xf32, #tpu.memory_space<vmem>>, %arg8: memref<24x56xbf16, #tpu.memory_space<vmem>>, %arg9: memref<24x1xf32, #tpu.memory_space<vmem>>, %arg10: memref<1x24x640xf32, #tpu.memory_space<vmem>>) attributes {dimension_semantics = [#tpu.dimension_semantics<parallel>, #tpu.dimension_semantics<parallel>], iteration_bounds = array<i64: 2, 1>, scalar_prefetch = 0 : i64, scratch_operands = 0 : i64, tpu.core_type = #tpu.core_type<tc>, window_params = [{transform_indices = @transform_0, window_bounds = array<i64: 1, 16, 640>}, {transform_indices = @transform_1, window_bounds = array<i64: 1, 8, 640>}, {pipeline_mode = #tpu.pipeline_mode<synchronous>, transform_indices = @transform_2, window_bounds = array<i64: 16, 1>}, {pipeline_mode = #tpu.pipeline_mode<synchronous>, transform_indices = @transform_3, window_bounds = array<i64: 16, 1>}, {pipeline_mode = #tpu.pipeline_mode<synchronous>, transform_indices = @transform_4, window_bounds = array<i64: 32, 16>}, {pipeline_mode = #tpu.pipeline_mode<synchronous>, transform_indices = @transform_5, window_bounds = array<i64: 32, 1>}, {pipeline_mode = #tpu.pipeline_mode<synchronous>, transform_indices = @transform_6, window_bounds = array<i64: 24, 56>}, {pipeline_mode = #tpu.pipeline_mode<synchronous>, transform_indices = @transform_7, window_bounds = array<i64: 24, 1>}, {transform_indices = @transform_8, window_bounds = array<i64: 1, 24, 640>}]} {
    %c0 = arith.constant 0 : index
    %c0_0 = arith.constant 0 : index
    %c0_1 = arith.constant 0 : index
    %0 = vector.load %arg2[%c0, %c0_0, %c0_1] : memref<1x16x640xf32, #tpu.memory_space<vmem>>, vector<1x16x640xf32>
    %1 = vector.shape_cast %0 : vector<1x16x640xf32> to vector<16x640xf32>
    %c0_2 = arith.constant 0 : index
    %c0_3 = arith.constant 0 : index
    %c0_4 = arith.constant 0 : index
    %2 = vector.load %arg3[%c0_2, %c0_3, %c0_4] : memref<1x8x640xf32, #tpu.memory_space<vmem>>, vector<1x8x640xf32>
    %3 = vector.shape_cast %2 : vector<1x8x640xf32> to vector<8x640xf32>
    %c0_5 = arith.constant 0 : index
    %c0_6 = arith.constant 0 : index
    %4 = vector.load %arg4[%c0_5, %c0_6] : memref<16x1xf32, #tpu.memory_space<vmem>>, vector<16x1xf32>
    %5 = vector.broadcast %4 : vector<16x1xf32> to vector<16x640xf32>
    %6 = arith.mulf %1, %5 : vector<16x640xf32>
    %c0_7 = arith.constant 0 : index
    %c0_8 = arith.constant 0 : index
    %7 = vector.load %arg5[%c0_7, %c0_8] : memref<16x1xf32, #tpu.memory_space<vmem>>, vector<16x1xf32>
    %8 = vector.broadcast %7 : vector<16x1xf32> to vector<16x640xf32>
    %9 = arith.addf %6, %8 : vector<16x640xf32>
    %cst = arith.constant 0.000000e+00 : f32
    %10 = vector.broadcast %cst : f32 to vector<16x640xf32>
    %11 = arith.maximumf %9, %10 : vector<16x640xf32>
    %c0_9 = arith.constant 0 : index
    %c0_10 = arith.constant 0 : index
    %12 = vector.load %arg6[%c0_9, %c0_10] : memref<32x16xbf16, #tpu.memory_space<vmem>>, vector<32x16xbf16>
    %13 = arith.truncf %11 : vector<16x640xf32> to vector<16x640xbf16>
    %cst_11 = arith.constant dense<0.000000e+00> : vector<32x640xf32>
    %14 = tpu.matmul %12, %13, %cst_11 {dimension_numbers = #tpu.dot_dimension_numbers<[1], [0], [0], [1], [0, 0, 1, 1], [], []>} : vector<32x16xbf16>, vector<16x640xbf16>, vector<32x640xf32> -> vector<32x640xf32>
    %c0_12 = arith.constant 0 : index
    %c0_13 = arith.constant 0 : index
    %15 = vector.load %arg7[%c0_12, %c0_13] : memref<32x1xf32, #tpu.memory_space<vmem>>, vector<32x1xf32>
    %16 = vector.broadcast %15 : vector<32x1xf32> to vector<32x640xf32>
    %17 = arith.addf %14, %16 : vector<32x640xf32>
    %cst_14 = arith.constant 0.000000e+00 : f32
    %18 = vector.broadcast %cst_14 : f32 to vector<32x640xf32>
    %19 = arith.maximumf %17, %18 : vector<32x640xf32>
    %20 = tpu.concatenate %19, %3, %1 in 0 : vector<32x640xf32>, vector<8x640xf32>, vector<16x640xf32> -> vector<56x640xf32>
    %21 = arith.truncf %20 : vector<56x640xf32> to vector<56x640xbf16>
    %c0_15 = arith.constant 0 : index
    %c0_16 = arith.constant 0 : index
    %22 = vector.load %arg8[%c0_15, %c0_16] : memref<24x56xbf16, #tpu.memory_space<vmem>>, vector<24x56xbf16>
    %cst_17 = arith.constant dense<0.000000e+00> : vector<24x640xf32>
    %23 = tpu.matmul %22, %21, %cst_17 {dimension_numbers = #tpu.dot_dimension_numbers<[1], [0], [0], [1], [0, 0, 1, 1], [], []>} : vector<24x56xbf16>, vector<56x640xbf16>, vector<24x640xf32> -> vector<24x640xf32>
    %c0_18 = arith.constant 0 : index
    %c0_19 = arith.constant 0 : index
    %24 = vector.load %arg9[%c0_18, %c0_19] : memref<24x1xf32, #tpu.memory_space<vmem>>, vector<24x1xf32>
    %25 = vector.broadcast %24 : vector<24x1xf32> to vector<24x640xf32>
    %26 = arith.addf %23, %25 : vector<24x640xf32>
    %c0_20 = arith.constant 0 : index
    %c0_21 = arith.constant 0 : index
    %c0_22 = arith.constant 0 : index
    %27 = vector.load %arg10[%c0_20, %c0_21, %c0_22] : memref<1x24x640xf32, #tpu.memory_space<vmem>>, vector<1x24x640xf32>
    %28 = vector.shape_cast %27 : vector<1x24x640xf32> to vector<24x640xf32>
    %29 = vector.shape_cast %26 : vector<24x640xf32> to vector<1x24x640xf32>
    tpu.vector_store %arg10[%c0_20, %c0_21, %c0_22], %29 {strides = array<i32>} : memref<1x24x640xf32, #tpu.memory_space<vmem>>, vector<1x24x640xf32>,
    return
  }
  func.func @transform_0(%arg0: i32, %arg1: i32) -> (i32, i32, i32) {
    %c0_i32 = arith.constant 0 : i32
    %c0_i32_0 = arith.constant 0 : i32
    return %arg0, %c0_i32, %arg1 : i32, i32, i32
  }
  func.func @transform_1(%arg0: i32, %arg1: i32) -> (i32, i32, i32) {
    %c0_i32 = arith.constant 0 : i32
    %c0_i32_0 = arith.constant 0 : i32
    return %arg0, %c0_i32, %arg1 : i32, i32, i32
  }
  func.func @transform_2(%arg0: i32, %arg1: i32) -> (i32, i32) {
    %c0_i32 = arith.constant 0 : i32
    %c0_i32_0 = arith.constant 0 : i32
    %c0_i32_1 = arith.constant 0 : i32
    return %c0_i32, %c0_i32_0 : i32, i32
  }
  func.func @transform_3(%arg0: i32, %arg1: i32) -> (i32, i32) {
    %c0_i32 = arith.constant 0 : i32
    %c0_i32_0 = arith.constant 0 : i32
    %c0_i32_1 = arith.constant 0 : i32
    return %c0_i32, %c0_i32_0 : i32, i32
  }
  func.func @transform_4(%arg0: i32, %arg1: i32) -> (i32, i32) {
    %c0_i32 = arith.constant 0 : i32
    %c0_i32_0 = arith.constant 0 : i32
    %c0_i32_1 = arith.constant 0 : i32
    return %c0_i32, %c0_i32_0 : i32, i32
  }
  func.func @transform_5(%arg0: i32, %arg1: i32) -> (i32, i32) {
    %c0_i32 = arith.constant 0 : i32
    %c0_i32_0 = arith.constant 0 : i32
    %c0_i32_1 = arith.constant 0 : i32
    return %c0_i32, %c0_i32_0 : i32, i32
  }
  func.func @transform_6(%arg0: i32, %arg1: i32) -> (i32, i32) {
    %c0_i32 = arith.constant 0 : i32
    %c0_i32_0 = arith.constant 0 : i32
    %c0_i32_1 = arith.constant 0 : i32
    return %c0_i32, %c0_i32_0 : i32, i32
  }
  func.func @transform_7(%arg0: i32, %arg1: i32) -> (i32, i32) {
    %c0_i32 = arith.constant 0 : i32
    %c0_i32_0 = arith.constant 0 : i32
    %c0_i32_1 = arith.constant 0 : i32
    return %c0_i32, %c0_i32_0 : i32, i32
  }
  func.func @transform_8(%arg0: i32, %arg1: i32) -> (i32, i32, i32) {
    %c0_i32 = arith.constant 0 : i32
    %c0_i32_0 = arith.constant 0 : i32
    return %arg0, %c0_i32, %arg1 : i32, i32, i32
  }
}

</mosaic_0001>

<llo_original>
// kernel: tpu_custom_call.1
$region0: #{tpu_custom_call.1}
  #allocation0 [shape = 'u32[]', space=smem, size = 0x4, offset = 0x4, fixed_abs, tag = 'smem constant byte address 0x4 - core index']
  #allocation1 [shape = 'u32[72,128]{1,0:T(1,128)}', space=vmem, size = 0x9000, scoped, tag = 'internal scratch']
  %s0 = inlined_call_operand.hbm [shape: f32[2,16,600], index: 0, kind: input, shape index: {}]
  %s1 = inlined_call_operand.hbm [shape: f32[2,8,600], index: 1, kind: input, shape index: {}]
  %s2 = inlined_call_operand.vmem [shape: f32[16,1], index: 2, kind: input, shape index: {}]
  %s3 = inlined_call_operand.vmem [shape: f32[16,1], index: 3, kind: input, shape index: {}]
  %s4 = inlined_call_operand.vmem [shape: bf16[32,16], index: 4, kind: input, shape index: {}]
  %s5 = inlined_call_operand.vmem [shape: f32[32,1], index: 5, kind: input, shape index: {}]
  %s6 = inlined_call_operand.vmem [shape: bf16[24,56], index: 6, kind: input, shape index: {}]
  %s7 = inlined_call_operand.vmem [shape: f32[24,1], index: 7, kind: input, shape index: {}]
  %s8 = inlined_call_operand.hbm [shape: f32[2,24,600], index: 8, kind: output, shape index: {}]
  %s9 = sld [smem:[#allocation0]]
  $region73: #{tpu_custom_call.1} parent=0
    _
  %s11 = ssub.s32 1, %s9
  %s12 = scalar_select 0, %s11, %s9
  $region1: #{tpu_custom_call.1} parent=0
    #allocation2 [shape = 'u8[81920]{0}', space=vmem, size = 0x14000, scoped, tag = 'input window, operand 0']
    #allocation3 [shape = 's32[2]{0}', space=sflag, size = 0x8, scoped, tag = 'scoped memory for tpu_custom_call.1']
    #allocation4 [shape = 's32[2]{0}', space=sflag, size = 0x8, scoped, tag = 'scoped memory for tpu_custom_call.1']
    #allocation5 [shape = 'u8[40960]{0}', space=vmem, size = 0xa000, scoped, tag = 'input window, operand 1']
    #allocation6 [shape = 's32[2]{0}', space=sflag, size = 0x8, scoped, tag = 'scoped memory for tpu_custom_call.1']
    #allocation7 [shape = 'u8[122880]{0}', space=vmem, size = 0x1e000, scoped, tag = 'output window, operand 0']
    %13 = vsyncpa [#allocation3], 0
    %s14 = scalar_lea.sflag [#allocation3], 1
    %15 = vsyncpa %s14, 0
    %16 = vsyncpa [#allocation6], 0
    %s17 = scalar_lea.sflag [#allocation6], 1
    %18 = vsyncpa %s17, 0
    %19 = vsyncpa [#allocation4], 0
    %s20 = scalar_lea.sflag [#allocation4], 1
    %21 = vsyncpa %s20, 0
    loop: start=0, step=1, limit=4
    $region2: #{tpu_custom_call.1} parent=1 // loop_pre_header
      _
    $region3: #{tpu_custom_call.1} parent=1 // loop_header
      %s23 = sphi 0, %s27
      %p24 = scmp.ge.s32.totalorder %s23, 4
      %s30 = sphi 0, %s42
      %s31 = sphi 0, %s38
      %s32 = sphi 0, %s30
      %s33 = sphi 0, %s31
      %s34 = sphi 0, %s32
      %s35 = sphi 0, %s33
      %s47 = sphi 0, %s49
      %s50 = sphi 0, %s47
      %s51 = sphi 0, %s50
      %s67 = sphi 0, %s51
      %s75 = sphi 0, %s77
      %s78 = sphi 0, %s75
      %s79 = sphi 0, %s78
      %s95 = sphi 0, %s79
      %s99 = sphi 0, %s99
      %s101 = sphi 0, %s99
      %s102 = sphi 0, %s101
      %s116 = sphi 0, %s102
      %s120 = sphi 0, %s120
      %s122 = sphi 0, %s120
      %s123 = sphi 0, %s122
      %s137 = sphi 0, %s123
      %s141 = sphi 0, %s141
      %s143 = sphi 0, %s141
      %s144 = sphi 0, %s143
      %s158 = sphi 0, %s144
      %s162 = sphi 0, %s162
      %s164 = sphi 0, %s162
      %s165 = sphi 0, %s164
      %s179 = sphi 0, %s165
      %s183 = sphi 0, %s183
      %s185 = sphi 0, %s183
      %s186 = sphi 0, %s185
      %s200 = sphi 0, %s186
      %s204 = sphi 0, %s204
      %s206 = sphi 0, %s204
      %s207 = sphi 0, %s206
      %s221 = sphi 0, %s207
      %s229 = sphi 0, %s231
      %s232 = sphi 0, %s229
      %s233 = sphi 0, %s232
      %s249 = sphi 0, %s233
    $region4: #{tpu_custom_call.1} parent=1 // loop_header_branch
      %26 = sbr.rel (%p24) target = $region8
    $region5: #{tpu_custom_call.1} parent=1 // loop_body
      %s28 = ssub.s32 %s23, 1
      %s29 = ssub.s32 %s23, 2
      %s36 = sadd.s32 1, %s31
      %p37 = scmp.ge.s32.totalorder %s36, 1
      %s38 = scalar_select %p37, 0, %s36
      %s39 = sadd.s32 1, %s30
      %s40 = scalar_select %p37, %s39, %s30
      %p41 = scmp.ge.s32.totalorder %s40, 2
      %s42 = scalar_select %p41, 0, %s40
      %s43 = ssub.s32 %s30, %s42
      %s44 = ssub.s32 %s31, %s38
      %s45 = sor.u32 %s43, %s44
      %p46 = scmp.eq.s32.totalorder %s45, 0
      %s48 = sadd.s32 %s47, 1
      %s49 = scalar_select %p46, %s47, %s48
      %p52 = pneg %p46
      %p53 = scmp.eq.s32.totalorder %s23, 1
      %p54 = por %p52, %p53
      %p55 = scmp.ne.s32.totalorder %s47, %s50
      %p56 = scmp.eq.s32.totalorder %s23, 0
      %p57 = por %p55, %p56
      %p58 = scmp.ne.s32.totalorder %s47, %s50
      %p59 = scmp.eq.s32.totalorder %s28, 1
      %p60 = por %p58, %p59
      %p61 = scmp.ne.s32.totalorder %s50, %s51
      %p62 = scmp.eq.s32.totalorder %s28, 0
      %p63 = por %p61, %p62
      %p64 = scmp.ne.s32.totalorder %s50, %s51
      %p65 = scmp.eq.s32.totalorder %s29, 1
      %p66 = por %p64, %p65
      %p68 = scmp.ne.s32.totalorder %s51, %s67
      %p69 = scmp.eq.s32.totalorder %s29, 0
      %p70 = por %p68, %p69
      %s71 = ssub.s32 %s30, %s42
      %s72 = ssub.s32 %s31, %s38
      %s73 = sor.u32 %s71, %s72
      %p74 = scmp.eq.s32.totalorder %s73, 0
      %s76 = sadd.s32 %s75, 1
      %s77 = scalar_select %p74, %s75, %s76
      %p80 = pneg %p74
      %p81 = scmp.eq.s32.totalorder %s23, 1
      %p82 = por %p80, %p81
      %p83 = scmp.ne.s32.totalorder %s75, %s78
      %p84 = scmp.eq.s32.totalorder %s23, 0
      %p85 = por %p83, %p84
      %p86 = scmp.ne.s32.totalorder %s75, %s78
      %p87 = scmp.eq.s32.totalorder %s28, 1
      %p88 = por %p86, %p87
      %p89 = scmp.ne.s32.totalorder %s78, %s79
      %p90 = scmp.eq.s32.totalorder %s28, 0
      %p91 = por %p89, %p90
      %p92 = scmp.ne.s32.totalorder %s78, %s79
      %p93 = scmp.eq.s32.totalorder %s29, 1
      %p94 = por %p92, %p93
      %p96 = scmp.ne.s32.totalorder %s79, %s95
      %p97 = scmp.eq.s32.totalorder %s29, 0
      %p98 = por %p96, %p97
      %s100 = sadd.s32 %s99, 1
      %p103 = scmp.eq.s32.totalorder %s23, 1
      %p104 = scmp.ne.s32.totalorder %s99, %s101
      %p105 = scmp.eq.s32.totalorder %s23, 0
      %p106 = por %p104, %p105
      %p107 = scmp.ne.s32.totalorder %s99, %s101
      %p108 = scmp.eq.s32.totalorder %s28, 1
      %p109 = por %p107, %p108
      %p110 = scmp.ne.s32.totalorder %s101, %s102
      %p111 = scmp.eq.s32.totalorder %s28, 0
      %p112 = por %p110, %p111
      %p113 = scmp.ne.s32.totalorder %s101, %s102
      %p114 = scmp.eq.s32.totalorder %s29, 1
      %p115 = por %p113, %p114
      %p117 = scmp.ne.s32.totalorder %s102, %s116
      %p118 = scmp.eq.s32.totalorder %s29, 0
      %p119 = por %p117, %p118
      %s121 = sadd.s32 %s120, 1
      %p124 = scmp.eq.s32.totalorder %s23, 1
      %p125 = scmp.ne.s32.totalorder %s120, %s122
      %p126 = scmp.eq.s32.totalorder %s23, 0
      %p127 = por %p125, %p126
      %p128 = scmp.ne.s32.totalorder %s120, %s122
      %p129 = scmp.eq.s32.totalorder %s28, 1
      %p130 = por %p128, %p129
      %p131 = scmp.ne.s32.totalorder %s122, %s123
      %p132 = scmp.eq.s32.totalorder %s28, 0
      %p133 = por %p131, %p132
      %p134 = scmp.ne.s32.totalorder %s122, %s123
      %p135 = scmp.eq.s32.totalorder %s29, 1
      %p136 = por %p134, %p135
      %p138 = scmp.ne.s32.totalorder %s123, %s137
      %p139 = scmp.eq.s32.totalorder %s29, 0
      %p140 = por %p138, %p139
      %s142 = sadd.s32 %s141, 1
      %p145 = scmp.eq.s32.totalorder %s23, 1
      %p146 = scmp.ne.s32.totalorder %s141, %s143
      %p147 = scmp.eq.s32.totalorder %s23, 0
      %p148 = por %p146, %p147
      %p149 = scmp.ne.s32.totalorder %s141, %s143
      %p150 = scmp.eq.s32.totalorder %s28, 1
      %p151 = por %p149, %p150
      %p152 = scmp.ne.s32.totalorder %s143, %s144
      %p153 = scmp.eq.s32.totalorder %s28, 0
      %p154 = por %p152, %p153
      %p155 = scmp.ne.s32.totalorder %s143, %s144
      %p156 = scmp.eq.s32.totalorder %s29, 1
      %p157 = por %p155, %p156
      %p159 = scmp.ne.s32.totalorder %s144, %s158
      %p160 = scmp.eq.s32.totalorder %s29, 0
      %p161 = por %p159, %p160
      %s163 = sadd.s32 %s162, 1
      %p166 = scmp.eq.s32.totalorder %s23, 1
      %p167 = scmp.ne.s32.totalorder %s162, %s164
      %p168 = scmp.eq.s32.totalorder %s23, 0
      %p169 = por %p167, %p168
      %p170 = scmp.ne.s32.totalorder %s162, %s164
      %p171 = scmp.eq.s32.totalorder %s28, 1
      %p172 = por %p170, %p171
      %p173 = scmp.ne.s32.totalorder %s164, %s165
      %p174 = scmp.eq.s32.totalorder %s28, 0
      %p175 = por %p173, %p174
      %p176 = scmp.ne.s32.totalorder %s164, %s165
      %p177 = scmp.eq.s32.totalorder %s29, 1
      %p178 = por %p176, %p177
      %p180 = scmp.ne.s32.totalorder %s165, %s179
      %p181 = scmp.eq.s32.totalorder %s29, 0
      %p182 = por %p180, %p181
      %s184 = sadd.s32 %s183, 1
      %p187 = scmp.eq.s32.totalorder %s23, 1
      %p188 = scmp.ne.s32.totalorder %s183, %s185
      %p189 = scmp.eq.s32.totalorder %s23, 0
      %p190 = por %p188, %p189
      %p191 = scmp.ne.s32.totalorder %s183, %s185
      %p192 = scmp.eq.s32.totalorder %s28, 1
      %p193 = por %p191, %p192
      %p194 = scmp.ne.s32.totalorder %s185, %s186
      %p195 = scmp.eq.s32.totalorder %s28, 0
      %p196 = por %p194, %p195
      %p197 = scmp.ne.s32.totalorder %s185, %s186
      %p198 = scmp.eq.s32.totalorder %s29, 1
      %p199 = por %p197, %p198
      %p201 = scmp.ne.s32.totalorder %s186, %s200
      %p202 = scmp.eq.s32.totalorder %s29, 0
      %p203 = por %p201, %p202
      %s205 = sadd.s32 %s204, 1
      %p208 = scmp.eq.s32.totalorder %s23, 1
      %p209 = scmp.ne.s32.totalorder %s204, %s206
      %p210 = scmp.eq.s32.totalorder %s23, 0
      %p211 = por %p209, %p210
      %p212 = scmp.ne.s32.totalorder %s204, %s206
      %p213 = scmp.eq.s32.totalorder %s28, 1
      %p214 = por %p212, %p213
      %p215 = scmp.ne.s32.totalorder %s206, %s207
      %p216 = scmp.eq.s32.totalorder %s28, 0
      %p217 = por %p215, %p216
      %p218 = scmp.ne.s32.totalorder %s206, %s207
      %p219 = scmp.eq.s32.totalorder %s29, 1
      %p220 = por %p218, %p219
      %p222 = scmp.ne.s32.totalorder %s207, %s221
      %p223 = scmp.eq.s32.totalorder %s29, 0
      %p224 = por %p222, %p223
      %s225 = ssub.s32 %s30, %s42
      %s226 = ssub.s32 %s31, %s38
      %s227 = sor.u32 %s225, %s226
      %p228 = scmp.eq.s32.totalorder %s227, 0
      %s230 = sadd.s32 %s229, 1
      %s231 = scalar_select %p228, %s229, %s230
      %p234 = pneg %p228
      %p235 = scmp.eq.s32.totalorder %s23, 1
      %p236 = por %p234, %p235
      %p237 = scmp.ne.s32.totalorder %s229, %s232
      %p238 = scmp.eq.s32.totalorder %s23, 0
      %p239 = por %p237, %p238
      %p240 = scmp.ne.s32.totalorder %s229, %s232
      %p241 = scmp.eq.s32.totalorder %s28, 1
      %p242 = por %p240, %p241
      %p243 = scmp.ne.s32.totalorder %s232, %s233
      %p244 = scmp.eq.s32.totalorder %s28, 0
      %p245 = por %p243, %p244
      %p246 = scmp.ne.s32.totalorder %s232, %s233
      %p247 = scmp.eq.s32.totalorder %s29, 1
      %p248 = por %p246, %p247
      %p250 = scmp.ne.s32.totalorder %s233, %s249
      %p251 = scmp.eq.s32.totalorder %s29, 0
      %p252 = por %p250, %p251
      %p253 = scmp.le.s32.totalorder 1, %s23
      %p254 = scmp.lt.s32.totalorder %s23, 3
      %p255 = pnand %p253, %p254
      %p256 = pneg %p255
      // Predicated region
      $region9: #{tpu_custom_call.1} parent=5 // pred_check
        _
      $region10: #{tpu_custom_call.1} parent=5 // pred_check_branch
        %258 = sbr.rel (%p255) target = $region12
      $region11: #{tpu_custom_call.1} parent=5 // pred_region
        %s259 = ssub.s32 %s23, 1
        // Predicated region
        $region13: #{tpu_custom_call.1} parent=11 // pred_check
          %p260 = pneg %p112
        $region14: #{tpu_custom_call.1} parent=11 // pred_check_branch
          %262 = sbr.rel (%p260) target = $region16
        $region15: #{tpu_custom_call.1} parent=11 // pred_region
          _
        $region16: #{tpu_custom_call.1} parent=11 // pred_fallthru
          _
        // Predicated region
        $region17: #{tpu_custom_call.1} parent=11 // pred_check
          %p263 = pneg %p133
        $region18: #{tpu_custom_call.1} parent=11 // pred_check_branch
          %265 = sbr.rel (%p263) target = $region20
        $region19: #{tpu_custom_call.1} parent=11 // pred_region
          _
        $region20: #{tpu_custom_call.1} parent=11 // pred_fallthru
          _
        // Predicated region
        $region21: #{tpu_custom_call.1} parent=11 // pred_check
          %p266 = pneg %p154
        $region22: #{tpu_custom_call.1} parent=11 // pred_check_branch
          %268 = sbr.rel (%p266) target = $region24
        $region23: #{tpu_custom_call.1} parent=11 // pred_region
          _
        $region24: #{tpu_custom_call.1} parent=11 // pred_fallthru
          _
        // Predicated region
        $region25: #{tpu_custom_call.1} parent=11 // pred_check
          %p269 = pneg %p175
        $region26: #{tpu_custom_call.1} parent=11 // pred_check_branch
          %271 = sbr.rel (%p269) target = $region28
        $region27: #{tpu_custom_call.1} parent=11 // pred_region
          _
        $region28: #{tpu_custom_call.1} parent=11 // pred_fallthru
          _
        // Predicated region
        $region29: #{tpu_custom_call.1} parent=11 // pred_check
          %p272 = pneg %p196
        $region30: #{tpu_custom_call.1} parent=11 // pred_check_branch
          %274 = sbr.rel (%p272) target = $region32
        $region31: #{tpu_custom_call.1} parent=11 // pred_region
          _
        $region32: #{tpu_custom_call.1} parent=11 // pred_fallthru
          _
        // Predicated region
        $region33: #{tpu_custom_call.1} parent=11 // pred_check
          %p275 = pneg %p217
        $region34: #{tpu_custom_call.1} parent=11 // pred_check_branch
          %277 = sbr.rel (%p275) target = $region36
        $region35: #{tpu_custom_call.1} parent=11 // pred_region
          _
        $region36: #{tpu_custom_call.1} parent=11 // pred_fallthru
          _
      $region12: #{tpu_custom_call.1} parent=5 // pred_fallthru
        _
      %p278 = scmp.lt.s32.totalorder %s23, 2
      // Predicated region
      $region37: #{tpu_custom_call.1} parent=5 // pred_check
        %p279 = pneg %p278
      $region38: #{tpu_custom_call.1} parent=5 // pred_check_branch
        %281 = sbr.rel (%p279) target = $region40
      $region39: #{tpu_custom_call.1} parent=5 // pred_region
        // Predicated region
        $region41: #{tpu_custom_call.1} parent=39 // pred_check
          %p282 = pneg %p57
        $region42: #{tpu_custom_call.1} parent=39 // pred_check_branch
          %284 = sbr.rel (%p282) target = $region44
        $region43: #{tpu_custom_call.1} parent=39 // pred_region
          %s285 = sand.u32 %s47, 1
          %s286 = scalar_lea.sflag [#allocation3], %s285
          %s287 = sand.u32 %s47, 1
          %s288 = smul.addr %s287, 80
          %s289 = scalar_lea.vmem [#allocation2], %s288
          %s290 = smul.u32 5, %s31
          %292 = vsyncadd %s286, 0
          %s293 = smul.addr %s30, 10
          %s294 = sadd.s32 %s290, %s293
          %s295 = smul.addr %s294, 8
          %s296 = scalar_lea.hbm %s0, %s295
          %s297 = sshll.u32 %s296, 4
          %s298 = int_to_ptr.hbm [resolvable:$true] %s297
          %s299 = sshll.u32 %s289, 4
          %s300 = int_to_ptr.vmem [resolvable:$true] %s299
          %305 = dma.hbm_to_vmem [thread:$0]  %s298, 1280, %s300, %s286, 640, 640, 40
        $region44: #{tpu_custom_call.1} parent=39 // pred_fallthru
          _
        // Predicated region
        $region45: #{tpu_custom_call.1} parent=39 // pred_check
          %p306 = pneg %p85
        $region46: #{tpu_custom_call.1} parent=39 // pred_check_branch
          %308 = sbr.rel (%p306) target = $region48
        $region47: #{tpu_custom_call.1} parent=39 // pred_region
          %s309 = sand.u32 %s75, 1
          %s310 = scalar_lea.sflag [#allocation6], %s309
          %s311 = sand.u32 %s75, 1
          %s312 = smul.addr %s311, 40
          %s313 = scalar_lea.vmem [#allocation5], %s312
          %s314 = smul.u32 5, %s31
          %316 = vsyncadd %s310, 0
          %s317 = smul.addr %s30, 5
          %s318 = sadd.s32 %s314, %s317
          %s319 = smul.addr %s318, 8
          %s320 = scalar_lea.hbm %s1, %s319
          %s322 = sshll.u32 %s320, 4
          %s323 = int_to_ptr.hbm [resolvable:$true] %s322
          %s324 = sshll.u32 %s313, 4
          %s325 = int_to_ptr.vmem [resolvable:$true] %s324
          %327 = dma.hbm_to_vmem [thread:$0]  %s323, 640, %s325, %s310
        $region48: #{tpu_custom_call.1} parent=39 // pred_fallthru
          _
      $region40: #{tpu_custom_call.1} parent=5 // pred_fallthru
        _
      %p328 = scmp.le.s32.totalorder 1, %s23
      %p329 = scmp.lt.s32.totalorder %s23, 3
      %p330 = pnand %p328, %p329
      %p331 = pneg %p330
      // Predicated region
      $region49: #{tpu_custom_call.1} parent=5 // pred_check
        _
      $region50: #{tpu_custom_call.1} parent=5 // pred_check_branch
        %333 = sbr.rel (%p330) target = $region52
      $region51: #{tpu_custom_call.1} parent=5 // pred_region
        %s334 = ssub.s32 %s23, 1
        %s335 = sand.u32 %s50, 1
        %s336 = scalar_lea.sflag [#allocation3], %s335
        %s337 = sand.u32 %s50, 1
        %s338 = smul.addr %s337, 80
        %s339 = scalar_lea.vmem [#allocation2], %s338
        // Predicated region
        $region53: #{tpu_custom_call.1} parent=51 // pred_check
          %p340 = pneg %p63
        $region54: #{tpu_custom_call.1} parent=51 // pred_check_branch
          %342 = sbr.rel (%p340) target = $region56
        $region55: #{tpu_custom_call.1} parent=51 // pred_region
          %344 = dma.done %s336, 1280
        $region56: #{tpu_custom_call.1} parent=51 // pred_fallthru
          _
        %s345 = sand.u32 %s78, 1
        %s346 = scalar_lea.sflag [#allocation6], %s345
        %s347 = sand.u32 %s78, 1
        %s348 = smul.addr %s347, 40
        %s349 = scalar_lea.vmem [#allocation5], %s348
        // Predicated region
        $region57: #{tpu_custom_call.1} parent=51 // pred_check
          %p350 = pneg %p91
        $region58: #{tpu_custom_call.1} parent=51 // pred_check_branch
          %352 = sbr.rel (%p350) target = $region60
        $region59: #{tpu_custom_call.1} parent=51 // pred_region
          %354 = dma.done %s346, 640
        $region60: #{tpu_custom_call.1} parent=51 // pred_fallthru
          _
        %s355 = sand.u32 %s50, 1
        %s356 = scalar_lea.sflag [#allocation3], %s355
        %s357 = sand.u32 %s50, 1
        %s358 = smul.addr %s357, 80
        %s359 = scalar_lea.vmem [#allocation2], %s358
        %p360 = pneg %p63
        %p361 = pneg %p60
        %s362 = sand.u32 %s78, 1
        %s363 = scalar_lea.sflag [#allocation6], %s362
        %s364 = sand.u32 %s78, 1
        %s365 = smul.addr %s364, 40
        %s366 = scalar_lea.vmem [#allocation5], %s365
        %p367 = pneg %p91
        %p368 = pneg %p88
        %p369 = pneg %p112
        %p370 = pneg %p109
        %p371 = pneg %p133
        %p372 = pneg %p130
        %p373 = pneg %p154
        %p374 = pneg %p151
        %p375 = pneg %p175
        %p376 = pneg %p172
        %p377 = pneg %p196
        %p378 = pneg %p193
        %p379 = pneg %p217
        %p380 = pneg %p214
        %p381 = pneg %p245
        %p382 = pneg %p242
        %s383 = sand.u32 %s232, 1
        %s384 = scalar_lea.sflag [#allocation4], %s383
        %s385 = sand.u32 %s232, 1
        %s386 = smul.addr %s385, 120
        %s387 = scalar_lea.vmem [#allocation7], %s386
        %s388 = smul.u32 5, %s33
        %s389 = smul.u32 5, %s33
        %s390 = smul.u32 5, %s33
        %v392 = vld [vmem:[%s339] sm:$0xff]
        %v393 = vld [vmem:[%s339 + $0x8] sm:$0xff]
        %v394 = vld [vmem:[%s339 + $0x10] sm:$0xff]
        %v395 = vld [vmem:[%s339 + $0x18] sm:$0xff]
        %v396 = vld [vmem:[%s339 + $0x20] sm:$0xff]
        %v397 = vld [vmem:[%s339 + $0x28] sm:$0xff]
        %v398 = vld [vmem:[%s339 + $0x30] sm:$0xff]
        %v399 = vld [vmem:[%s339 + $0x38] sm:$0xff]
        %v400 = vld [vmem:[%s339 + $0x40] sm:$0xff]
        %v401 = vld [vmem:[%s339 + $0x48] sm:$0xff]
        %v402 = vld [vmem:[%s349] sm:$0xff]
        %v403 = vld [vmem:[%s349 + $0x8] sm:$0xff]
        %v404 = vld [vmem:[%s349 + $0x10] sm:$0xff]
        %v405 = vld [vmem:[%s349 + $0x18] sm:$0xff]
        %v406 = vld [vmem:[%s349 + $0x20] sm:$0xff]
        %v407 = vld [vmem:[%s2] sm:$0xff]
        %v408 = vld [vmem:[%s2 + $0x8] sm:$0xff]
        %410 = vset.pattern.permute.xlu0 0
        %411 = vperm.xlu0 %410, %v407
        %v412 = vpop.permute.xlu0 %411
        %415 = vset.pattern.permute.xlu0 0
        %416 = vperm.xlu0 %415, %v408
        %v417 = vpop.permute.xlu0 %416
        %v419 = vmul.f32 %v392, %v412
        %v420 = vmul.f32 %v393, %v412
        %v421 = vmul.f32 %v394, %v412
        %v422 = vmul.f32 %v395, %v412
        %v423 = vmul.f32 %v396, %v412
        %v424 = vmul.f32 %v397, %v417
        %v425 = vmul.f32 %v398, %v417
        %v426 = vmul.f32 %v399, %v417
        %v427 = vmul.f32 %v400, %v417
        %v428 = vmul.f32 %v401, %v417
        %v429 = vld [vmem:[%s3] sm:$0xff]
        %v430 = vld [vmem:[%s3 + $0x8] sm:$0xff]
        %432 = vset.pattern.permute.xlu0 0
        %433 = vperm.xlu0 %432, %v429
        %v434 = vpop.permute.xlu0 %433
        %437 = vset.pattern.permute.xlu0 0
        %438 = vperm.xlu0 %437, %v430
        %v439 = vpop.permute.xlu0 %438
        %v441 = vadd.f32 %v419, %v434
        %v442 = vadd.f32 %v420, %v434
        %v443 = vadd.f32 %v421, %v434
        %v444 = vadd.f32 %v422, %v434
        %v445 = vadd.f32 %v423, %v434
        %v446 = vadd.f32 %v424, %v439
        %v447 = vadd.f32 %v425, %v439
        %v448 = vadd.f32 %v426, %v439
        %v449 = vadd.f32 %v427, %v439
        %v450 = vadd.f32 %v428, %v439
        %v451 = vmax.f32 %v441, 0.0
        %v452 = vmax.f32 %v442, 0.0
        %v453 = vmax.f32 %v443, 0.0
        %v454 = vmax.f32 %v444, 0.0
        %v455 = vmax.f32 %v445, 0.0
        %v456 = vmax.f32 %v446, 0.0
        %v457 = vmax.f32 %v447, 0.0
        %v458 = vmax.f32 %v448, 0.0
        %v459 = vmax.f32 %v449, 0.0
        %v460 = vmax.f32 %v450, 0.0
        %v461 = vld [vmem:[%s4] sm:$0xf]
        %v462 = vld [vmem:[%s4 + $0x4] sm:$0xf]
        %v463 = vld [vmem:[%s4 + $0x8] sm:$0xf]
        %v464 = vld [vmem:[%s4 + $0xc] sm:$0xf]
        %v465 = vpack.c.bf16 %v456, %v451
        %v466 = vpack.c.bf16 %v457, %v452
        %v467 = vpack.c.bf16 %v458, %v453
        %v468 = vpack.c.bf16 %v459, %v454
        %v469 = vpack.c.bf16 %v460, %v455
        %v470 = vld [vmem:[%s5] sm:$0xff]
        %v471 = vld [vmem:[%s5 + $0x8] sm:$0xff]
        %v472 = vld [vmem:[%s5 + $0x10] sm:$0xff]
        %v473 = vld [vmem:[%s5 + $0x18] sm:$0xff]
        %475 = vset.pattern.permute.xlu0 0
        %476 = vperm.xlu0 %475, %v470
        %v477 = vpop.permute.xlu0 %476
        %480 = vset.pattern.permute.xlu0 0
        %481 = vperm.xlu0 %480, %v471
        %v482 = vpop.permute.xlu0 %481
        %485 = vset.pattern.permute.xlu0 0
        %486 = vperm.xlu0 %485, %v472
        %v487 = vpop.permute.xlu0 %486
        %490 = vset.pattern.permute.xlu0 0
        %491 = vperm.xlu0 %490, %v473
        %v492 = vpop.permute.xlu0 %491
        %v498 = vunpack.c.l.b16 %v461
        %v499 = vunpack.c.l.b16 %v462
        %v500 = vunpack.c.l.b16 %v463
        %v501 = vunpack.c.l.b16 %v464
        %v502 = vpack.c.b16 %v499, %v498
        %v503 = vpack.c.b16 %v501, %v500
        %vm504 = vcmask 130048
        %v506 = vsel %vm504, %v502, 0
        %v509 = vsel %vm504, %v503, 0
        %511 = vmatpush.bf16.msra.mxu0 0
        %512 = vmatpush.bf16.msra.mxu0 0
        %513 = vmatpush.bf16.msra.mxu0 0
        %514 = vmatpush.bf16.msra.mxu0 0
        %515 = vmatpush.bf16.msra.mxu0 0
        %516 = vmatpush.bf16.msra.mxu0 0
        %517 = vmatpush.bf16.msra.mxu0 0
        %518 = vmatpush.bf16.msra.mxu0 %v465
        %519 = vmatmul.bf16.gmra.mxu0 %v506
        %v520 = vpop.f32.mrf.mxu0
        %v521 = vadd.f32 %v477, %v520
        %v522 = vpop.f32.mrf.mxu0
        %v523 = vadd.f32 %v482, %v522
        %524 = vmatmul.bf16.gmra.mxu0 %v509
        %v525 = vpop.f32.mrf.mxu0
        %v526 = vadd.f32 %v487, %v525
        %v527 = vpop.f32.mrf.mxu0
        %v528 = vadd.f32 %v492, %v527
        %529 = vdwg.mxu0
        %530 = vmatpush.bf16.msra.mxu0 0
        %531 = vmatpush.bf16.msra.mxu0 0
        %532 = vmatpush.bf16.msra.mxu0 0
        %533 = vmatpush.bf16.msra.mxu0 0
        %534 = vmatpush.bf16.msra.mxu0 0
        %535 = vmatpush.bf16.msra.mxu0 0
        %536 = vmatpush.bf16.msra.mxu0 0
        %537 = vmatpush.bf16.msra.mxu0 %v466
        %538 = vmatmul.bf16.gmra.mxu0 %v506
        %v539 = vpop.f32.mrf.mxu0
        %v540 = vadd.f32 %v477, %v539
        %v541 = vpop.f32.mrf.mxu0
        %v542 = vadd.f32 %v482, %v541
        %543 = vmatmul.bf16.gmra.mxu0 %v509
        %v544 = vpop.f32.mrf.mxu0
        %v545 = vadd.f32 %v487, %v544
        %v546 = vpop.f32.mrf.mxu0
        %v547 = vadd.f32 %v492, %v546
        %548 = vdwg.mxu0
        %549 = vmatpush.bf16.msra.mxu0 0
        %550 = vmatpush.bf16.msra.mxu0 0
        %551 = vmatpush.bf16.msra.mxu0 0
        %552 = vmatpush.bf16.msra.mxu0 0
        %553 = vmatpush.bf16.msra.mxu0 0
        %554 = vmatpush.bf16.msra.mxu0 0
        %555 = vmatpush.bf16.msra.mxu0 0
        %556 = vmatpush.bf16.msra.mxu0 %v467
        %557 = vmatmul.bf16.gmra.mxu0 %v506
        %v558 = vpop.f32.mrf.mxu0
        %v559 = vadd.f32 %v477, %v558
        %v560 = vpop.f32.mrf.mxu0
        %v561 = vadd.f32 %v482, %v560
        %562 = vmatmul.bf16.gmra.mxu0 %v509
        %v563 = vpop.f32.mrf.mxu0
        %v564 = vadd.f32 %v487, %v563
        %v565 = vpop.f32.mrf.mxu0
        %v566 = vadd.f32 %v492, %v565
        %567 = vdwg.mxu0
        %568 = vmatpush.bf16.msra.mxu0 0
        %569 = vmatpush.bf16.msra.mxu0 0
        %570 = vmatpush.bf16.msra.mxu0 0
        %571 = vmatpush.bf16.msra.mxu0 0
        %572 = vmatpush.bf16.msra.mxu0 0
        %573 = vmatpush.bf16.msra.mxu0 0
        %574 = vmatpush.bf16.msra.mxu0 0
        %575 = vmatpush.bf16.msra.mxu0 %v468
        %576 = vmatmul.bf16.gmra.mxu0 %v506
        %v577 = vpop.f32.mrf.mxu0
        %v578 = vadd.f32 %v477, %v577
        %v579 = vpop.f32.mrf.mxu0
        %v580 = vadd.f32 %v482, %v579
        %581 = vmatmul.bf16.gmra.mxu0 %v509
        %v582 = vpop.f32.mrf.mxu0
        %v583 = vadd.f32 %v487, %v582
        %v584 = vpop.f32.mrf.mxu0
        %v585 = vadd.f32 %v492, %v584
        %586 = vdwg.mxu0
        %587 = vmatpush.bf16.msra.mxu0 0
        %588 = vmatpush.bf16.msra.mxu0 0
        %589 = vmatpush.bf16.msra.mxu0 0
        %590 = vmatpush.bf16.msra.mxu0 0
        %591 = vmatpush.bf16.msra.mxu0 0
        %592 = vmatpush.bf16.msra.mxu0 0
        %593 = vmatpush.bf16.msra.mxu0 0
        %594 = vmatpush.bf16.msra.mxu0 %v469
        %595 = vmatmul.bf16.gmra.mxu0 %v506
        %v596 = vpop.f32.mrf.mxu0
        %v597 = vadd.f32 %v477, %v596
        %v598 = vpop.f32.mrf.mxu0
        %v599 = vadd.f32 %v482, %v598
        %600 = vmatmul.bf16.gmra.mxu0 %v509
        %v601 = vpop.f32.mrf.mxu0
        %v602 = vadd.f32 %v487, %v601
        %v603 = vpop.f32.mrf.mxu0
        %v604 = vadd.f32 %v492, %v603
        %605 = vdwg.mxu0
        %v606 = vmax.f32 %v521, 0.0
        %v607 = vmax.f32 %v540, 0.0
        %v608 = vmax.f32 %v559, 0.0
        %v609 = vmax.f32 %v578, 0.0
        %v610 = vmax.f32 %v597, 0.0
        %v611 = vmax.f32 %v523, 0.0
        %v612 = vmax.f32 %v542, 0.0
        %v613 = vmax.f32 %v561, 0.0
        %v614 = vmax.f32 %v580, 0.0
        %v615 = vmax.f32 %v599, 0.0
        %v616 = vmax.f32 %v526, 0.0
        %v617 = vmax.f32 %v545, 0.0
        %v618 = vmax.f32 %v564, 0.0
        %v619 = vmax.f32 %v583, 0.0
        %v620 = vmax.f32 %v602, 0.0
        %v621 = vmax.f32 %v528, 0.0
        %v622 = vmax.f32 %v547, 0.0
        %v623 = vmax.f32 %v566, 0.0
        %v624 = vmax.f32 %v585, 0.0
        %v625 = vmax.f32 %v604, 0.0
        %v626 = vpack.c.bf16 %v611, %v606
        %v627 = vpack.c.bf16 %v612, %v607
        %v628 = vpack.c.bf16 %v613, %v608
        %v629 = vpack.c.bf16 %v614, %v609
        %v630 = vpack.c.bf16 %v615, %v610
        %v631 = vpack.c.bf16 %v621, %v616
        %v632 = vpack.c.bf16 %v622, %v617
        %v633 = vpack.c.bf16 %v623, %v618
        %v634 = vpack.c.bf16 %v624, %v619
        %v635 = vpack.c.bf16 %v625, %v620
        %v636 = vpack.c.bf16 %v392, %v402
        %v637 = vpack.c.bf16 %v393, %v403
        %v638 = vpack.c.bf16 %v394, %v404
        %v639 = vpack.c.bf16 %v395, %v405
        %v640 = vpack.c.bf16 %v396, %v406
        %v641 = vpack.c.bf16 %v397, %v397
        %v642 = vpack.c.bf16 %v398, %v398
        %v643 = vpack.c.bf16 %v399, %v399
        %v644 = vpack.c.bf16 %v400, %v400
        %v645 = vpack.c.bf16 %v401, %v401
        %v646 = vld [vmem:[%s6] sm:$0xf]
        %v647 = vld [vmem:[%s6 + $0x4] sm:$0xf]
        %v648 = vld [vmem:[%s6 + $0x8] sm:$0xf]
        %v649 = vld [vmem:[%s7] sm:$0xff]
        %v650 = vld [vmem:[%s7 + $0x8] sm:$0xff]
        %v651 = vld [vmem:[%s7 + $0x10] sm:$0xff]
        %653 = vset.pattern.permute.xlu0 0
        %654 = vperm.xlu0 %653, %v649
        %v655 = vpop.permute.xlu0 %654
        %658 = vset.pattern.permute.xlu0 0
        %659 = vperm.xlu0 %658, %v650
        %v660 = vpop.permute.xlu0 %659
        %663 = vset.pattern.permute.xlu0 0
        %664 = vperm.xlu0 %663, %v651
        %v665 = vpop.permute.xlu0 %664
        %v670 = vunpack.c.l.b16 %v646
        %v671 = vunpack.c.l.b16 %v647
        %v672 = vunpack.c.l.b16 %v648
        %v673 = vpack.c.b16 %v671, %v670
        %v674 = vpack.c.b16 %v672, %v672
        %vm675 = vcmask 457728
        %v677 = vsel %vm675, %v673, 0
        %v680 = vsel %vm675, %v674, 0
        %vm682 = vcmask 1043456
        %v684 = vsel %vm682, %v641, 0
        %v687 = vsel %vm682, %v642, 0
        %v690 = vsel %vm682, %v643, 0
        %v693 = vsel %vm682, %v644, 0
        %v696 = vsel %vm682, %v645, 0
        %698 = vmatpush.bf16.msra.mxu0 0
        %699 = vmatpush.bf16.msra.mxu0 0
        %700 = vmatpush.bf16.msra.mxu0 0
        %701 = vmatpush.bf16.msra.mxu0 0
        %702 = vmatpush.bf16.msra.mxu0 %v684
        %703 = vmatpush.bf16.msra.mxu0 %v636
        %704 = vmatpush.bf16.msra.mxu0 %v631
        %705 = vmatpush.bf16.msra.mxu0 %v626
        %706 = vmatmul.bf16.gmra.mxu0 %v677
        %v707 = vpop.f32.mrf.mxu0
        %v708 = vadd.f32 %v655, %v707
        %v709 = vpop.f32.mrf.mxu0
        %v710 = vadd.f32 %v660, %v709
        %711 = vmatmul.bf16.gmra.mxu0 %v680
        %v712 = vpop.f32.mrf.mxu0
        %v713 = vadd.f32 %v665, %v712
        %v714 = vpop.f32.mrf.mxu0
        %715 = vdwg.mxu0
        %716 = vmatpush.bf16.msra.mxu0 0
        %717 = vmatpush.bf16.msra.mxu0 0
        %718 = vmatpush.bf16.msra.mxu0 0
        %719 = vmatpush.bf16.msra.mxu0 0
        %720 = vmatpush.bf16.msra.mxu0 %v687
        %721 = vmatpush.bf16.msra.mxu0 %v637
        %722 = vmatpush.bf16.msra.mxu0 %v632
        %723 = vmatpush.bf16.msra.mxu0 %v627
        %724 = vmatmul.bf16.gmra.mxu0 %v677
        %v725 = vpop.f32.mrf.mxu0
        %v726 = vadd.f32 %v655, %v725
        %v727 = vpop.f32.mrf.mxu0
        %v728 = vadd.f32 %v660, %v727
        %729 = vmatmul.bf16.gmra.mxu0 %v680
        %v730 = vpop.f32.mrf.mxu0
        %v731 = vadd.f32 %v665, %v730
        %v732 = vpop.f32.mrf.mxu0
        %733 = vdwg.mxu0
        %734 = vmatpush.bf16.msra.mxu0 0
        %735 = vmatpush.bf16.msra.mxu0 0
        %736 = vmatpush.bf16.msra.mxu0 0
        %737 = vmatpush.bf16.msra.mxu0 0
        %738 = vmatpush.bf16.msra.mxu0 %v690
        %739 = vmatpush.bf16.msra.mxu0 %v638
        %740 = vmatpush.bf16.msra.mxu0 %v633
        %741 = vmatpush.bf16.msra.mxu0 %v628
        %742 = vmatmul.bf16.gmra.mxu0 %v677
        %v743 = vpop.f32.mrf.mxu0
        %v744 = vadd.f32 %v655, %v743
        %v745 = vpop.f32.mrf.mxu0
        %v746 = vadd.f32 %v660, %v745
        %747 = vmatmul.bf16.gmra.mxu0 %v680
        %v748 = vpop.f32.mrf.mxu0
        %v749 = vadd.f32 %v665, %v748
        %v750 = vpop.f32.mrf.mxu0
        %751 = vdwg.mxu0
        %752 = vmatpush.bf16.msra.mxu0 0
        %753 = vmatpush.bf16.msra.mxu0 0
        %754 = vmatpush.bf16.msra.mxu0 0
        %755 = vmatpush.bf16.msra.mxu0 0
        %756 = vmatpush.bf16.msra.mxu0 %v693
        %757 = vmatpush.bf16.msra.mxu0 %v639
        %758 = vmatpush.bf16.msra.mxu0 %v634
        %759 = vmatpush.bf16.msra.mxu0 %v629
        %760 = vmatmul.bf16.gmra.mxu0 %v677
        %v761 = vpop.f32.mrf.mxu0
        %v762 = vadd.f32 %v655, %v761
        %v763 = vpop.f32.mrf.mxu0
        %v764 = vadd.f32 %v660, %v763
        %765 = vmatmul.bf16.gmra.mxu0 %v680
        %v766 = vpop.f32.mrf.mxu0
        %v767 = vadd.f32 %v665, %v766
        %v768 = vpop.f32.mrf.mxu0
        %769 = vdwg.mxu0
        %770 = vmatpush.bf16.msra.mxu0 0
        %771 = vmatpush.bf16.msra.mxu0 0
        %772 = vmatpush.bf16.msra.mxu0 0
        %773 = vmatpush.bf16.msra.mxu0 0
        %774 = vmatpush.bf16.msra.mxu0 %v696
        %775 = vmatpush.bf16.msra.mxu0 %v640
        %776 = vmatpush.bf16.msra.mxu0 %v635
        %777 = vmatpush.bf16.msra.mxu0 %v630
        %778 = vmatmul.bf16.gmra.mxu0 %v677
        %v779 = vpop.f32.mrf.mxu0
        %v780 = vadd.f32 %v655, %v779
        %v781 = vpop.f32.mrf.mxu0
        %v782 = vadd.f32 %v660, %v781
        %783 = vmatmul.bf16.gmra.mxu0 %v680
        %v784 = vpop.f32.mrf.mxu0
        %v785 = vadd.f32 %v665, %v784
        %v786 = vpop.f32.mrf.mxu0
        %787 = vdwg.mxu0
        %788 = vst [vmem:[%s387] sm:$0xff] %v708
        %789 = vst [vmem:[%s387 + $0x8] sm:$0xff] %v726
        %790 = vst [vmem:[%s387 + $0x10] sm:$0xff] %v744
        %791 = vst [vmem:[%s387 + $0x18] sm:$0xff] %v762
        %792 = vst [vmem:[%s387 + $0x20] sm:$0xff] %v780
        %793 = vst [vmem:[%s387 + $0x28] sm:$0xff] %v710
        %794 = vst [vmem:[%s387 + $0x30] sm:$0xff] %v728
        %795 = vst [vmem:[%s387 + $0x38] sm:$0xff] %v746
        %796 = vst [vmem:[%s387 + $0x40] sm:$0xff] %v764
        %797 = vst [vmem:[%s387 + $0x48] sm:$0xff] %v782
        %798 = vst [vmem:[%s387 + $0x50] sm:$0xff] %v713
        %799 = vst [vmem:[%s387 + $0x58] sm:$0xff] %v731
        %800 = vst [vmem:[%s387 + $0x60] sm:$0xff] %v749
        %801 = vst [vmem:[%s387 + $0x68] sm:$0xff] %v767
        %802 = vst [vmem:[%s387 + $0x70] sm:$0xff] %v785
        %s803 = sand.u32 %s232, 1
        %s804 = scalar_lea.sflag [#allocation4], %s803
        %s805 = sand.u32 %s232, 1
        %s806 = smul.addr %s805, 120
        %s807 = scalar_lea.vmem [#allocation7], %s806
        // Predicated region
        $region61: #{tpu_custom_call.1} parent=51 // pred_check
          %p808 = pneg %p242
        $region62: #{tpu_custom_call.1} parent=51 // pred_check_branch
          %810 = sbr.rel (%p808) target = $region64
        $region63: #{tpu_custom_call.1} parent=51 // pred_region
          %s811 = smul.u32 5, %s33
          %813 = vsyncadd %s804, 0
          %s814 = smul.addr %s32, 15
          %s815 = sadd.s32 %s811, %s814
          %s816 = smul.addr %s815, 8
          %s817 = scalar_lea.hbm %s8, %s816
          %s818 = sshll.u32 %s807, 4
          %s819 = int_to_ptr.vmem [resolvable:$true] %s818
          %s820 = sshll.u32 %s817, 4
          %s821 = int_to_ptr.hbm [resolvable:$true] %s820
          %826 = dma.vmem_to_hbm [thread:$0]  %s819, 1920, %s821, %s804, 640, 640, 40
        $region64: #{tpu_custom_call.1} parent=51 // pred_fallthru
          _
      $region52: #{tpu_custom_call.1} parent=5 // pred_fallthru
        _
      %p827 = scmp.le.s32.totalorder 2, %s23
      // Predicated region
      $region65: #{tpu_custom_call.1} parent=5 // pred_check
        %p828 = pneg %p827
      $region66: #{tpu_custom_call.1} parent=5 // pred_check_branch
        %830 = sbr.rel (%p828) target = $region68
      $region67: #{tpu_custom_call.1} parent=5 // pred_region
        %s831 = ssub.s32 %s23, 2
        // Predicated region
        $region69: #{tpu_custom_call.1} parent=67 // pred_check
          %p832 = pneg %p248
        $region70: #{tpu_custom_call.1} parent=67 // pred_check_branch
          %834 = sbr.rel (%p832) target = $region72
        $region71: #{tpu_custom_call.1} parent=67 // pred_region
          %s835 = sand.u32 %s233, 1
          %s836 = scalar_lea.sflag [#allocation4], %s835
          %s837 = sand.u32 %s233, 1
          %s838 = smul.addr %s837, 120
          %s839 = scalar_lea.vmem [#allocation7], %s838
          %841 = dma.done %s836, 1920
        $region72: #{tpu_custom_call.1} parent=67 // pred_fallthru
          _
      $region68: #{tpu_custom_call.1} parent=5 // pred_fallthru
        _
    $region6: #{tpu_custom_call.1} parent=1 // loop_footer
      %s27 = sadd.s32 1, %s23
    $region7: #{tpu_custom_call.1} parent=1 // loop_footer_branch
      %22 = sbr.rel target = $region3
    $region8: #{tpu_custom_call.1} parent=1 // loop_exit
      _
    %842 = vsyncpa [#allocation3], 1
    %s843 = scalar_lea.sflag [#allocation3], 1
    %844 = vsyncpa %s843, 1
    %845 = vsyncpa [#allocation6], 1
    %s846 = scalar_lea.sflag [#allocation6], 1
    %847 = vsyncpa %s846, 1
    %848 = vsyncpa [#allocation4], 1
    %s849 = scalar_lea.sflag [#allocation4], 1
    %850 = vsyncpa %s849, 1

</llo_original>
